<compile_context>
chip_gen: v7x
topology: tpu7x:2x2x1
jax: 0.10.0
libtpu: 0.0.40
codegen_flags: <defaults>
</compile_context>

<pallas_src>
import jax
import jax.numpy as jnp
from jax import lax
from jax.experimental import pallas as pl
from jax.experimental.pallas import tpu as pltpu

EPS = 1e-5
LANE = 128


# -----------------------------------------------------------------------------
# Kernel: one grid step applies K chained ResnetBlocks to the carried
# activation, which lives in o_ref (resident output block, constant index).
# -----------------------------------------------------------------------------
def _resnet_chain_kernel(
    x_hbm,      # [N, Dp]     f32  ANY/HBM (DMA'd into o_ref once at step 0)
    w1t_ref,    # [K, Dp, Dp] bf16 VMEM (streamed per step)
    w2t_ref,    # [K, Dp, Dp] bf16 VMEM (streamed per step)
    vec_ref,    # [K, 8, Dp]  f32  VMEM rows: g1, be1, a1, g2, be2, a2, pad, pad
    o_ref,      # [N, Dp]     f32  VMEM (resident accumulator, written back once)
    dma_sem,    # DMA semaphore scratch
):
    @pl.when(pl.program_id(0) == 0)
    def _init():
        cp = pltpu.make_async_copy(x_hbm, o_ref, dma_sem)
        cp.start()
        cp.wait()

    def linear_bn_prelu(h_in, wt, g, be, a_row):
        # Linear (bias dropped: cancelled by train-mode BN): bf16 x bf16 on
        # the MXU with f32 accumulation.
        h = jnp.dot(h_in.astype(jnp.bfloat16), wt,
                    preferred_element_type=jnp.float32)
        # BatchNorm1d (training mode, biased variance), folded scale on the
        # centered activation: y = (h - mean) * (g * rsqrt(var + eps)) + be.
        mean = jnp.mean(h, axis=0, keepdims=True)
        hc = h - mean
        var = jnp.mean(hc * hc, axis=0, keepdims=True)
        scale = g * lax.rsqrt(var + EPS)
        y = hc * scale + be
        # PReLU (single scalar parameter, pre-broadcast to a [1, Dp] row).
        return jnp.where(y > 0.0, y, a_row * y)

    out = o_ref[...].astype(jnp.float32)
    k = w1t_ref.shape[0]
    for j in range(k):  # static unroll: K blocks per grid step
        v = vec_ref[j]                              # [8, Dp]
        h = linear_bn_prelu(out, w1t_ref[j], v[0:1], v[1:2], v[2:3])
        h = linear_bn_prelu(h,   w2t_ref[j], v[3:4], v[4:5], v[5:6])
        out = out + h                               # ResnetBlock skip connection
    o_ref[...] = out.astype(o_ref.dtype)


# -----------------------------------------------------------------------------
# One-time parameter preprocessing (transpose, pad to lane-dense Dp, bf16 cast,
# fold gamma/beta/PReLU-alpha into one vector table; Linear bias dropped).
# -----------------------------------------------------------------------------
def prepare_params(params, lane=LANE):
    nb, d, _ = params["w1"].shape
    dp = ((d + lane - 1) // lane) * lane

    def prep_w(w):  # [nb, d, d] -> [nb, dp, dp], W^T, zero-padded, bf16
        wt = jnp.transpose(w, (0, 2, 1))
        wt = jnp.pad(wt, ((0, 0), (0, dp - d), (0, dp - d)))
        return wt.astype(jnp.bfloat16)

    def prep_v(v):  # [nb, d] -> [nb, dp]
        return jnp.pad(v.astype(jnp.float32), ((0, 0), (0, dp - d)))

    a1_row = jnp.broadcast_to(params["a1"][:, None].astype(jnp.float32), (nb, d))
    a2_row = jnp.broadcast_to(params["a2"][:, None].astype(jnp.float32), (nb, d))
    rows = [params["g1"], params["be1"], a1_row,
            params["g2"], params["be2"], a2_row]
    vec = jnp.stack([prep_v(r) for r in rows], axis=1)            # [nb, 6, dp]
    vec = jnp.pad(vec, ((0, 0), (0, 8 - vec.shape[1]), (0, 0)))   # [nb, 8, dp]
    # Linear biases b1/b2 intentionally dropped: BN (train mode) subtracts the
    # batch mean, which cancels any per-column bias exactly.
    return {"w1t": prep_w(params["w1"]), "w2t": prep_w(params["w2"]), "vec": vec}


# -----------------------------------------------------------------------------
# VMEM-budget helpers (generation-aware).
# -----------------------------------------------------------------------------
def _vmem_capacity_bytes():
    try:
        return int(pltpu.get_tpu_info().vmem_capacity_bytes)
    except Exception:
        return 64 << 20  # conservative fallback (v7x per-core VMEM)


def _choose_blocks_per_step(nb, dp, cap, max_blocks_per_step=None):
    # Streamed bytes per block, double-buffered by the BlockSpec pipeline:
    # W1^T + W2^T (bf16) + vector table (f32).
    per_block = 2 * (2 * dp * dp * 2 + 8 * dp * 4)
    budget = int(cap * 0.4)
    max_k = max(1, budget // per_block)
    if max_blocks_per_step is not None:
        max_k = min(max_k, max_blocks_per_step)
    k = 1
    for cand in range(1, nb + 1):
        if cand <= max_k and nb % cand == 0:
            k = cand
    return k


# -----------------------------------------------------------------------------
# Forward: a chain of nb ResnetBlocks (nb == 1 is exactly the PyTorch module).
# -----------------------------------------------------------------------------
def resnet_blocks_forward(x, prepped, max_blocks_per_step=None):
    n, d = x.shape
    nb, dp, _ = prepped["w1t"].shape
    x_pad = jnp.pad(x.astype(jnp.float32), ((0, 0), (0, dp - d)))

    cap = _vmem_capacity_bytes()
    k = _choose_blocks_per_step(nb, dp, cap, max_blocks_per_step)

    # Actual footprint: resident accumulator (o_ref) + double-buffered streamed
    # weights/vectors + headroom for elementwise temporaries.  x stays in HBM.
    resident = n * dp * 4
    streamed = 2 * k * (2 * dp * dp * 2 + 8 * dp * 4)
    temps = 4 * n * dp * 4
    footprint = resident + streamed + temps
    ceiling = int(cap * 0.8)
    assert footprint <= ceiling, (
        f"VMEM footprint {footprint} B exceeds {ceiling} B; "
        f"reduce N or blocks-per-step")
    vmem_limit = min(max(int(footprint * 1.5), 16 << 20), ceiling)

    grid_spec = pltpu.PrefetchScalarGridSpec(
        num_scalar_prefetch=0,
        grid=(nb // k,),
        in_specs=[
            pl.BlockSpec(memory_space=pl.ANY),               # x: stays in HBM
            pl.BlockSpec((k, dp, dp), lambda i: (i, 0, 0)),   # W1^T (streamed)
            pl.BlockSpec((k, dp, dp), lambda i: (i, 0, 0)),   # W2^T (streamed)
            pl.BlockSpec((k, 8, dp), lambda i: (i, 0, 0)),    # gamma/beta/prelu
        ],
        out_specs=pl.BlockSpec((n, dp), lambda i: (0, 0)),    # resident accum
        scratch_shapes=[pltpu.SemaphoreType.DMA],
    )

    out_pad = pl.pallas_call(
        _resnet_chain_kernel,
        out_shape=jax.ShapeDtypeStruct((n, dp), jnp.float32),
        grid_spec=grid_spec,
        compiler_params=pltpu.CompilerParams(
            dimension_semantics=("arbitrary",),   # sequential chain
            vmem_limit_bytes=vmem_limit,
        ),
    )(x_pad, prepped["w1t"], prepped["w2t"], prepped["vec"])

    return out_pad[:, :d].astype(x.dtype)


# -----------------------------------------------------------------------------
# Pure-JAX reference (train-mode BN, WITH Linear bias — matches the PyTorch
# ResnetBlock.forward; validates that dropping the bias in the kernel is exact).
# -----------------------------------------------------------------------------
def resnet_blocks_reference(x, params):
    nb = params["w1"].shape[0]

    def bn_prelu(h, g, b, a):
        m = h.mean(0, keepdims=True)
        v = ((h - m) ** 2).mean(0, keepdims=True)
        y = (h - m) / jnp.sqrt(v + EPS) * g + b
        return jnp.where(y > 0, y, a * y)

    out = x.astype(jnp.float32)
    for i in range(nb):
        h = out @ params["w1"][i].T + params["b1"][i]
        h = bn_prelu(h, params["g1"][i], params["be1"][i], params["a1"][i])
        h = h @ params["w2"][i].T + params["b2"][i]
        h = bn_prelu(h, params["g2"][i], params["be2"][i], params["a2"][i])
        out = out + h  # ResnetBlock skip
    return out


def init_params(key, n_blocks, dim):
    keys = jax.random.split(key, 4)
    scale = 1.0 / jnp.sqrt(dim)
    return {
        "w1": jax.random.uniform(keys[0], (n_blocks, dim, dim), jnp.float32, -scale, scale),
        "b1": jax.random.uniform(keys[1], (n_blocks, dim), jnp.float32, -scale, scale),
        "g1": jnp.ones((n_blocks, dim), jnp.float32),    # BatchNorm gamma init
        "be1": jnp.zeros((n_blocks, dim), jnp.float32),  # BatchNorm beta init
        "a1": jnp.full((n_blocks,), 0.25, jnp.float32),  # PReLU init
        "w2": jax.random.uniform(keys[2], (n_blocks, dim, dim), jnp.float32, -scale, scale),
        "b2": jax.random.uniform(keys[3], (n_blocks, dim), jnp.float32, -scale, scale),
        "g2": jnp.ones((n_blocks, dim), jnp.float32),
        "be2": jnp.zeros((n_blocks, dim), jnp.float32),
        "a2": jnp.full((n_blocks,), 0.25, jnp.float32),
    }


if __name__ == "__main__":
    N, D = 8, 32  # batch, feature dim
    key = jax.random.PRNGKey(0)
    kx, kp1, kp2 = jax.random.split(key, 3)
    x = jax.random.normal(kx, (N, D), jnp.float32)

    # Case 1: a single ResnetBlock — exactly the PyTorch module's forward.
    params1 = init_params(kp1, 1, D)
    out1 = jax.block_until_ready(resnet_blocks_forward(x, prepare_params(params1)))
    ref1 = resnet_blocks_reference(x, params1)
    assert out1.shape == (N, D)
    assert jnp.allclose(out1, ref1, atol=5e-2, rtol=5e-2), "single-block mismatch"

    # Case 2: a chain of 4 blocks, capped at 2 blocks per grid step (grid=(2,)):
    # exercises streamed weights + the resident o_ref accumulator carry.
    params2 = init_params(kp2, 4, D)
    out2 = jax.block_until_ready(
        resnet_blocks_forward(x, prepare_params(params2), max_blocks_per_step=2))
    ref2 = resnet_blocks_reference(x, params2)
    assert out2.shape == (N, D)
    assert jnp.allclose(out2, ref2, atol=5e-2, rtol=5e-2), "stacked-block mismatch"

    print("KERNEL_OK")
</pallas_src>

<mosaic_0001>
module attributes {stable_mosaic.version = 11 : i64} {
  func.func @_resnet_chain_kernel(%arg0: i32, %arg1: memref<8x128xf32, #tpu.memory_space<any>>, %arg2: memref<1x128x128xbf16, #tpu.memory_space<vmem>>, %arg3: memref<1x128x128xbf16, #tpu.memory_space<vmem>>, %arg4: memref<1x8x128xf32, #tpu.memory_space<vmem>>, %arg5: memref<8x128xf32, #tpu.memory_space<vmem>>, %arg6: memref<!tpu.dma_semaphore, #tpu.memory_space<semaphore_mem>>) attributes {dimension_semantics = [#tpu.dimension_semantics<arbitrary>], iteration_bounds = array<i64: 1>, scalar_prefetch = 0 : i64, scratch_operands = 1 : i64, tpu.core_type = #tpu.core_type<tc>, window_params = [{}, {transform_indices = @transform_1, window_bounds = array<i64: 1, 128, 128>}, {transform_indices = @transform_2, window_bounds = array<i64: 1, 128, 128>}, {transform_indices = @transform_3, window_bounds = array<i64: 1, 8, 128>}, {pipeline_mode = #tpu.pipeline_mode<synchronous>, transform_indices = @transform_4, window_bounds = array<i64: 8, 128>}]} {
    %c0_i32 = arith.constant 0 : i32
    %0 = arith.cmpi eq, %arg0, %c0_i32 : i32
    %1 = arith.extui %0 : i1 to i32
    %c0_i32_0 = arith.constant 0 : i32
    %2 = arith.cmpi ne, %1, %c0_i32_0 : i32
    scf.if %2 {
      tpu.enqueue_dma source(%arg1 : memref<8x128xf32, #tpu.memory_space<any>>) target(%arg5 : memref<8x128xf32, #tpu.memory_space<vmem>>) target_semaphore(%arg6 : memref<!tpu.dma_semaphore, #tpu.memory_space<semaphore_mem>>)
      tpu.wait_dma2 semaphore(%arg6 : memref<!tpu.dma_semaphore, #tpu.memory_space<semaphore_mem>>) src(%arg1 : memref<8x128xf32, #tpu.memory_space<any>>) dst(%arg5 : memref<8x128xf32, #tpu.memory_space<vmem>>)
    } else {
    }
    %c0 = arith.constant 0 : index
    %c0_1 = arith.constant 0 : index
    %3 = vector.load %arg5[%c0, %c0_1] : memref<8x128xf32, #tpu.memory_space<vmem>>, vector<8x128xf32>
    %c0_2 = arith.constant 0 : index
    %c0_3 = arith.constant 0 : index
    %c0_4 = arith.constant 0 : index
    %4 = vector.load %arg4[%c0_2, %c0_3, %c0_4] : memref<1x8x128xf32, #tpu.memory_space<vmem>>, vector<1x8x128xf32>
    %5 = vector.shape_cast %4 : vector<1x8x128xf32> to vector<8x128xf32>
    %c0_5 = arith.constant 0 : index
    %c0_6 = arith.constant 0 : index
    %c0_7 = arith.constant 0 : index
    %6 = vector.load %arg2[%c0_5, %c0_6, %c0_7] : memref<1x128x128xbf16, #tpu.memory_space<vmem>>, vector<1x128x128xbf16>
    %7 = vector.shape_cast %6 : vector<1x128x128xbf16> to vector<128x128xbf16>
    %8 = vector.extract_strided_slice %5 {offsets = [0, 0], sizes = [1, 128], strides = [1, 1]} : vector<8x128xf32> to vector<1x128xf32>
    %9 = vector.extract_strided_slice %5 {offsets = [1, 0], sizes = [1, 128], strides = [1, 1]} : vector<8x128xf32> to vector<1x128xf32>
    %10 = vector.extract_strided_slice %5 {offsets = [2, 0], sizes = [1, 128], strides = [1, 1]} : vector<8x128xf32> to vector<1x128xf32>
    %11 = arith.truncf %3 : vector<8x128xf32> to vector<8x128xbf16>
    %cst = arith.constant dense<0.000000e+00> : vector<8x128xf32>
    %12 = tpu.matmul %11, %7, %cst {dimension_numbers = #tpu.dot_dimension_numbers<[1], [0], [0], [1], [0, 0, 1, 1], [], []>} : vector<8x128xbf16>, vector<128x128xbf16>, vector<8x128xf32> -> vector<8x128xf32>
    %cst_8 = arith.constant dense<0.000000e+00> : vector<128xf32>
    %13 = vector.multi_reduction <add>, %12, %cst_8 [0] : vector<8x128xf32> to vector<128xf32>
    %14 = vector.shape_cast %13 : vector<128xf32> to vector<1x128xf32>
    %cst_9 = arith.constant 8.000000e+00 : f32
    %15 = vector.broadcast %cst_9 : f32 to vector<1x128xf32>
    %16 = arith.divf %14, %15 : vector<1x128xf32>
    %17 = vector.broadcast %16 : vector<1x128xf32> to vector<8x128xf32>
    %18 = arith.subf %12, %17 : vector<8x128xf32>
    %19 = arith.mulf %18, %18 : vector<8x128xf32>
    %cst_10 = arith.constant dense<0.000000e+00> : vector<128xf32>
    %20 = vector.multi_reduction <add>, %19, %cst_10 [0] : vector<8x128xf32> to vector<128xf32>
    %21 = vector.shape_cast %20 : vector<128xf32> to vector<1x128xf32>
    %cst_11 = arith.constant 8.000000e+00 : f32
    %22 = vector.broadcast %cst_11 : f32 to vector<1x128xf32>
    %23 = arith.divf %21, %22 : vector<1x128xf32>
    %cst_12 = arith.constant 9.99999974E-6 : f32
    %24 = vector.broadcast %cst_12 : f32 to vector<1x128xf32>
    %25 = arith.addf %23, %24 : vector<1x128xf32>
    %26 = math.rsqrt %25 : vector<1x128xf32>
    %27 = arith.mulf %8, %26 : vector<1x128xf32>
    %28 = vector.broadcast %27 : vector<1x128xf32> to vector<8x128xf32>
    %29 = arith.mulf %18, %28 : vector<8x128xf32>
    %30 = vector.broadcast %9 : vector<1x128xf32> to vector<8x128xf32>
    %31 = arith.addf %29, %30 : vector<8x128xf32>
    %cst_13 = arith.constant 0.000000e+00 : f32
    %32 = vector.broadcast %cst_13 : f32 to vector<8x128xf32>
    %33 = arith.cmpf ogt, %31, %32 : vector<8x128xf32>
    %34 = vector.broadcast %10 : vector<1x128xf32> to vector<8x128xf32>
    %35 = arith.mulf %34, %31 : vector<8x128xf32>
    %36 = arith.select %33, %31, %35 : vector<8x128xi1>, vector<8x128xf32>
    %c0_14 = arith.constant 0 : index
    %c0_15 = arith.constant 0 : index
    %c0_16 = arith.constant 0 : index
    %37 = vector.load %arg3[%c0_14, %c0_15, %c0_16] : memref<1x128x128xbf16, #tpu.memory_space<vmem>>, vector<1x128x128xbf16>
    %38 = vector.shape_cast %37 : vector<1x128x128xbf16> to vector<128x128xbf16>
    %39 = vector.extract_strided_slice %5 {offsets = [3, 0], sizes = [1, 128], strides = [1, 1]} : vector<8x128xf32> to vector<1x128xf32>
    %40 = vector.extract_strided_slice %5 {offsets = [4, 0], sizes = [1, 128], strides = [1, 1]} : vector<8x128xf32> to vector<1x128xf32>
    %41 = vector.extract_strided_slice %5 {offsets = [5, 0], sizes = [1, 128], strides = [1, 1]} : vector<8x128xf32> to vector<1x128xf32>
    %42 = arith.truncf %36 : vector<8x128xf32> to vector<8x128xbf16>
    %cst_17 = arith.constant dense<0.000000e+00> : vector<8x128xf32>
    %43 = tpu.matmul %42, %38, %cst_17 {dimension_numbers = #tpu.dot_dimension_numbers<[1], [0], [0], [1], [0, 0, 1, 1], [], []>} : vector<8x128xbf16>, vector<128x128xbf16>, vector<8x128xf32> -> vector<8x128xf32>
    %cst_18 = arith.constant dense<0.000000e+00> : vector<128xf32>
    %44 = vector.multi_reduction <add>, %43, %cst_18 [0] : vector<8x128xf32> to vector<128xf32>
    %45 = vector.shape_cast %44 : vector<128xf32> to vector<1x128xf32>
    %cst_19 = arith.constant 8.000000e+00 : f32
    %46 = vector.broadcast %cst_19 : f32 to vector<1x128xf32>
    %47 = arith.divf %45, %46 : vector<1x128xf32>
    %48 = vector.broadcast %47 : vector<1x128xf32> to vector<8x128xf32>
    %49 = arith.subf %43, %48 : vector<8x128xf32>
    %50 = arith.mulf %49, %49 : vector<8x128xf32>
    %cst_20 = arith.constant dense<0.000000e+00> : vector<128xf32>
    %51 = vector.multi_reduction <add>, %50, %cst_20 [0] : vector<8x128xf32> to vector<128xf32>
    %52 = vector.shape_cast %51 : vector<128xf32> to vector<1x128xf32>
    %cst_21 = arith.constant 8.000000e+00 : f32
    %53 = vector.broadcast %cst_21 : f32 to vector<1x128xf32>
    %54 = arith.divf %52, %53 : vector<1x128xf32>
    %cst_22 = arith.constant 9.99999974E-6 : f32
    %55 = vector.broadcast %cst_22 : f32 to vector<1x128xf32>
    %56 = arith.addf %54, %55 : vector<1x128xf32>
    %57 = math.rsqrt %56 : vector<1x128xf32>
    %58 = arith.mulf %39, %57 : vector<1x128xf32>
    %59 = vector.broadcast %58 : vector<1x128xf32> to vector<8x128xf32>
    %60 = arith.mulf %49, %59 : vector<8x128xf32>
    %61 = vector.broadcast %40 : vector<1x128xf32> to vector<8x128xf32>
    %62 = arith.addf %60, %61 : vector<8x128xf32>
    %cst_23 = arith.constant 0.000000e+00 : f32
    %63 = vector.broadcast %cst_23 : f32 to vector<8x128xf32>
    %64 = arith.cmpf ogt, %62, %63 : vector<8x128xf32>
    %65 = vector.broadcast %41 : vector<1x128xf32> to vector<8x128xf32>
    %66 = arith.mulf %65, %62 : vector<8x128xf32>
    %67 = arith.select %64, %62, %66 : vector<8x128xi1>, vector<8x128xf32>
    %68 = arith.addf %3, %67 : vector<8x128xf32>
    %c0_24 = arith.constant 0 : index
    %c0_25 = arith.constant 0 : index
    %69 = vector.load %arg5[%c0_24, %c0_25] : memref<8x128xf32, #tpu.memory_space<vmem>>, vector<8x128xf32>
    tpu.vector_store %arg5[%c0_24, %c0_25], %68 {strides = array<i32>} : memref<8x128xf32, #tpu.memory_space<vmem>>, vector<8x128xf32>,
    return
  }
  func.func @transform_1(%arg0: i32) -> (i32, i32, i32) {
    %c0_i32 = arith.constant 0 : i32
    %c0_i32_0 = arith.constant 0 : i32
    %c0_i32_1 = arith.constant 0 : i32
    return %arg0, %c0_i32, %c0_i32_0 : i32, i32, i32
  }
  func.func @transform_2(%arg0: i32) -> (i32, i32, i32) {
    %c0_i32 = arith.constant 0 : i32
    %c0_i32_0 = arith.constant 0 : i32
    %c0_i32_1 = arith.constant 0 : i32
    return %arg0, %c0_i32, %c0_i32_0 : i32, i32, i32
  }
  func.func @transform_3(%arg0: i32) -> (i32, i32, i32) {
    %c0_i32 = arith.constant 0 : i32
    %c0_i32_0 = arith.constant 0 : i32
    %c0_i32_1 = arith.constant 0 : i32
    return %arg0, %c0_i32, %c0_i32_0 : i32, i32, i32
  }
  func.func @transform_4(%arg0: i32) -> (i32, i32) {
    %c0_i32 = arith.constant 0 : i32
    %c0_i32_0 = arith.constant 0 : i32
    %c0_i32_1 = arith.constant 0 : i32
    return %c0_i32, %c0_i32_0 : i32, i32
  }
}

</mosaic_0001>

<llo_original>
// kernel: tpu_custom_call.1
$region0: #{tpu_custom_call.1}
  #allocation0 [shape = 'u32[]', space=smem, size = 0x4, offset = 0x4, fixed_abs, tag = 'smem constant byte address 0x4 - core index']
  #allocation1 [shape = 'u32[144,128]{1,0:T(1,128)}', space=vmem, size = 0x12000, scoped, tag = 'internal scratch']
  #allocation2 [shape = 's32[1]{0}', space=sflag, size = 0x4, scoped, tag = 'scratch operand']
  #allocation9 [shape = 's32[]', space=sflag, size = 0x4, offset = 0, fixed_abs, tag = 'sflag constant byte address 0x0 - dummy sync flag']
  #allocation10 [shape = 's32[]', space=sflag, size = 0x4, offset = 0, fixed_abs, tag = 'sflag constant byte address 0x0 - dummy sync flag']
  #allocation11 [shape = 'u32[]', space=smem, size = 0x4, offset = 0x44, fixed_abs, tag = 'smem constant byte address 0x44 - assertion arg 0']
  #allocation12 [shape = 'u32[]', space=smem, size = 0x4, offset = 0x48, fixed_abs, tag = 'smem constant byte address 0x48 - assertion arg 1']
  %s0 = inlined_call_operand.hbm [shape: f32[8,128], index: 0, kind: input, shape index: {}]
  %s1 = inlined_call_operand.hbm [shape: bf16[1,128,128], index: 1, kind: input, shape index: {}]
  %s2 = inlined_call_operand.hbm [shape: bf16[1,128,128], index: 2, kind: input, shape index: {}]
  %s3 = inlined_call_operand.vmem [shape: f32[1,8,128], index: 3, kind: input, shape index: {}]
  %s4 = inlined_call_operand.hbm [shape: f32[8,128], index: 4, kind: output, shape index: {}]
  %s5 = sld [smem:[#allocation0]]
  $region38: #{tpu_custom_call.1} parent=0
    _
  %s7 = ssub.s32 1, %s5
  %s8 = scalar_select 0, %s7, %s5
  $region1: #{tpu_custom_call.1} parent=0
    #allocation3 [shape = 'u8[32768]{0}', space=vmem, size = 0x8000, scoped, tag = 'input window, operand 1, single buffered']
    #allocation4 [shape = 's32[1]{0}', space=sflag, size = 0x4, scoped, tag = 'scoped memory for tpu_custom_call.1']
    #allocation5 [shape = 's32[1]{0}', space=sflag, size = 0x4, scoped, tag = 'scoped memory for tpu_custom_call.1']
    #allocation6 [shape = 'u8[32768]{0}', space=vmem, size = 0x8000, scoped, tag = 'input window, operand 2, single buffered']
    #allocation7 [shape = 's32[1]{0}', space=sflag, size = 0x4, scoped, tag = 'scoped memory for tpu_custom_call.1']
    #allocation8 [shape = 'u8[4096]{0}', space=vmem, size = 0x1000, scoped, tag = 'output window, operand 0, single buffered']
    %9 = vsyncpa [#allocation4], 0
    %10 = vsyncpa [#allocation7], 0
    %11 = vsyncpa [#allocation5], 0
    // Predicated region
    $region2: #{tpu_custom_call.1} parent=1 // pred_check
      _
    $region3: #{tpu_custom_call.1} parent=1 // pred_check_branch
      %13 = sbr.rel (0) target = $region5
    $region4: #{tpu_custom_call.1} parent=1 // pred_region
      %s15 = ssub.s32 1024, 1024
      %16 = vsyncadd [#allocation4], %s15
      %s17 = sshll.u32 [#allocation3], 4
      %s18 = int_to_ptr.vmem [resolvable:$true] %s17
      %23 = dma.hbm_to_vmem [thread:$0]  %s1, 1024, %s18, [#allocation4], 64, 64, 4
    $region5: #{tpu_custom_call.1} parent=1 // pred_fallthru
      _
    // Predicated region
    $region6: #{tpu_custom_call.1} parent=1 // pred_check
      _
    $region7: #{tpu_custom_call.1} parent=1 // pred_check_branch
      %25 = sbr.rel (0) target = $region9
    $region8: #{tpu_custom_call.1} parent=1 // pred_region
      %s27 = ssub.s32 1024, 1024
      %28 = vsyncadd [#allocation7], %s27
      %s29 = sshll.u32 [#allocation6], 4
      %s30 = int_to_ptr.vmem [resolvable:$true] %s29
      %35 = dma.hbm_to_vmem [thread:$0]  %s2, 1024, %s30, [#allocation7], 64, 64, 4
    $region9: #{tpu_custom_call.1} parent=1 // pred_fallthru
      _
    // Predicated region
    $region10: #{tpu_custom_call.1} parent=1 // pred_check
      _
    $region11: #{tpu_custom_call.1} parent=1 // pred_check_branch
      %37 = sbr.rel (0) target = $region13
    $region12: #{tpu_custom_call.1} parent=1 // pred_region
      _
    $region13: #{tpu_custom_call.1} parent=1 // pred_fallthru
      _
    // Predicated region
    $region14: #{tpu_custom_call.1} parent=1 // pred_check
      _
    $region15: #{tpu_custom_call.1} parent=1 // pred_check_branch
      %39 = sbr.rel (0) target = $region17
    $region16: #{tpu_custom_call.1} parent=1 // pred_region
      %40 = dma.done [#allocation4], 1024
    $region17: #{tpu_custom_call.1} parent=1 // pred_fallthru
      _
    // Predicated region
    $region18: #{tpu_custom_call.1} parent=1 // pred_check
      _
    $region19: #{tpu_custom_call.1} parent=1 // pred_check_branch
      %42 = sbr.rel (0) target = $region21
    $region20: #{tpu_custom_call.1} parent=1 // pred_region
      %43 = dma.done [#allocation7], 1024
    $region21: #{tpu_custom_call.1} parent=1 // pred_fallthru
      _
    %p45 = scmp.eq.s32.totalorder 0, 0
    // Predicated region
    $region22: #{tpu_custom_call.1} parent=1 // pred_check
      %p46 = pneg %p45
    $region23: #{tpu_custom_call.1} parent=1 // pred_check_branch
      %48 = sbr.rel (%p46) target = $region25
    $region24: #{tpu_custom_call.1} parent=1 // pred_region
      // Predicated region
      $region26: #{tpu_custom_call.1} parent=24 // pred_check
        _
      $region27: #{tpu_custom_call.1} parent=24 // pred_check_branch
        %50 = sbr.rel target = $region29
      $region28: #{tpu_custom_call.1} parent=24 // pred_region
        %51 = sst [smem:[#allocation11]] [#allocation10]
        %52 = sst [smem:[#allocation12]] [#allocation9]
      $region29: #{tpu_custom_call.1} parent=24 // pred_fallthru
        _
      %54 = shalt.err (0)
      %s56 = sshll.u32 [#allocation8], 4
      %s57 = int_to_ptr.vmem [resolvable:$true] %s56
      %59 = dma.hbm_to_vmem [thread:$0]  %s0, 128, %s57, [#allocation2]
      %s60 = smul.u32 8, 1
      %s61 = sshll.u32 %s60, 4
      %62 = dma.done [#allocation2], %s61
    $region25: #{tpu_custom_call.1} parent=1 // pred_fallthru
      _
    %v63 = vld [vmem:[#allocation8] sm:$0xff]
    %v64 = vld [vmem:[%s3] sm:$0xff]
    %v65 = vld [vmem:[#allocation3] sm:$0xf]
    %v66 = vld [vmem:[#allocation3 + $0x4] sm:$0xf]
    %v67 = vld [vmem:[#allocation3 + $0x8] sm:$0xf]
    %v68 = vld [vmem:[#allocation3 + $0xc] sm:$0xf]
    %v69 = vld [vmem:[#allocation3 + $0x10] sm:$0xf]
    %v70 = vld [vmem:[#allocation3 + $0x14] sm:$0xf]
    %v71 = vld [vmem:[#allocation3 + $0x18] sm:$0xf]
    %v72 = vld [vmem:[#allocation3 + $0x1c] sm:$0xf]
    %v73 = vld [vmem:[#allocation3 + $0x20] sm:$0xf]
    %v74 = vld [vmem:[#allocation3 + $0x24] sm:$0xf]
    %v75 = vld [vmem:[#allocation3 + $0x28] sm:$0xf]
    %v76 = vld [vmem:[#allocation3 + $0x2c] sm:$0xf]
    %v77 = vld [vmem:[#allocation3 + $0x30] sm:$0xf]
    %v78 = vld [vmem:[#allocation3 + $0x34] sm:$0xf]
    %v79 = vld [vmem:[#allocation3 + $0x38] sm:$0xf]
    %v80 = vld [vmem:[#allocation3 + $0x3c] sm:$0xf]
    %v81 = vpack.c.bf16 %v63, %v63
    %v98 = vunpack.c.l.b16 %v65
    %v99 = vunpack.c.l.b16 %v66
    %v100 = vunpack.c.l.b16 %v67
    %v101 = vunpack.c.l.b16 %v68
    %v102 = vunpack.c.l.b16 %v69
    %v103 = vunpack.c.l.b16 %v70
    %v104 = vunpack.c.l.b16 %v71
    %v105 = vunpack.c.l.b16 %v72
    %v106 = vunpack.c.l.b16 %v73
    %v107 = vunpack.c.l.b16 %v74
    %v108 = vunpack.c.l.b16 %v75
    %v109 = vunpack.c.l.b16 %v76
    %v110 = vunpack.c.l.b16 %v77
    %v111 = vunpack.c.l.b16 %v78
    %v112 = vunpack.c.l.b16 %v79
    %v113 = vunpack.c.l.b16 %v80
    %v114 = vpack.c.b16 %v99, %v98
    %v115 = vpack.c.b16 %v101, %v100
    %v116 = vpack.c.b16 %v103, %v102
    %v117 = vpack.c.b16 %v105, %v104
    %v118 = vpack.c.b16 %v107, %v106
    %v119 = vpack.c.b16 %v109, %v108
    %v120 = vpack.c.b16 %v111, %v110
    %v121 = vpack.c.b16 %v113, %v112
    %130 = vmatprep.subr.bf16.mxu0 0
    %131 = vmatpush1.bf16.msra.mxu0 %v114
    %132 = vmatprep.subr.bf16.mxu0 0
    %133 = vmatpush1.bf16.msra.mxu0 %v115
    %134 = vmatprep.subr.bf16.mxu0 0
    %135 = vmatpush1.bf16.msra.mxu0 %v116
    %136 = vmatprep.subr.bf16.mxu0 0
    %137 = vmatpush1.bf16.msra.mxu0 %v117
    %138 = vmatprep.subr.bf16.mxu0 0
    %139 = vmatpush1.bf16.msra.mxu0 %v118
    %140 = vmatprep.subr.bf16.mxu0 0
    %141 = vmatpush1.bf16.msra.mxu0 %v119
    %142 = vmatprep.subr.bf16.mxu0 0
    %143 = vmatpush1.bf16.msra.mxu0 %v120
    %144 = vmatprep.subr.bf16.mxu0 0
    %145 = vmatpush1.bf16.msra.mxu0 %v121
    %146 = vmatprep.subr.bf16.mxu0 0
    %147 = vmatpush1.bf16.msra.mxu0 0
    %148 = vmatprep.subr.bf16.mxu0 0
    %149 = vmatpush1.bf16.msra.mxu0 0
    %150 = vmatprep.subr.bf16.mxu0 0
    %151 = vmatpush1.bf16.msra.mxu0 0
    %152 = vmatprep.subr.bf16.mxu0 0
    %153 = vmatpush1.bf16.msra.mxu0 0
    %154 = vmatprep.subr.bf16.mxu0 0
    %155 = vmatpush1.bf16.msra.mxu0 0
    %156 = vmatprep.subr.bf16.mxu0 0
    %157 = vmatpush1.bf16.msra.mxu0 0
    %158 = vmatprep.subr.bf16.mxu0 0
    %159 = vmatpush1.bf16.msra.mxu0 0
    %160 = vmatprep.subr.bf16.mxu0 0
    %161 = vmatpush1.bf16.msra.mxu0 0
    %162 = vmatprep.mubr.bf16.mxu0 0
    %163 = vmatmul.mubr.bf16.gmra.mrb[0].mxu0 %v81
    %v164 = vpop.f32.mrb[0].mxu0
    %v165 = vadd.f32 0.0, %v164
    %v166 = vpop.f32.mrb[0].mxu0
    %v167 = vpop.f32.mrb[0].mxu0
    %v168 = vpop.f32.mrb[0].mxu0
    %169 = vdwg.mxu0
    %v170 = vrot.slane %v165, 4
    %v171 = vadd.f32 %v165, %v170
    %v172 = vrot.slane %v171, 2
    %v173 = vadd.f32 %v171, %v172
    %v174 = vrot.slane %v173, 1
    %v175 = vadd.f32 %v173, %v174
    %v176 = vrcp.pop 8.0
    %v177 = vmul.f32 %v175, %v176
    %v178 = vsub.f32 %v165, %v177
    %v179 = vmul.f32 %v178, %v178
    %v180 = vrot.slane %v179, 4
    %v181 = vadd.f32 %v179, %v180
    %v182 = vrot.slane %v181, 2
    %v183 = vadd.f32 %v181, %v182
    %v184 = vrot.slane %v183, 1
    %v185 = vadd.f32 %v183, %v184
    %v186 = vmul.f32 %v185, %v176
    %v187 = vadd.f32 %v186, 1e-05
    %v188 = vrsqrt.pop %v187
    %v189 = vmul.f32 %v64, %v188
    %v190 = vlaneseq
    %v191 = vshrl.u32 %v190, 7
    %v192 = vsub.s32 0, %v191
    %v193 = vrot.slane %v189, %v192
    %v194 = vmul.f32 %v178, %v193
    %v195 = vlaneseq
    %v196 = vshrl.u32 %v195, 7
    %v197 = vsub.s32 1, %v196
    %v198 = vrot.slane %v64, %v197
    %v199 = vadd.f32 %v194, %v198
    %vm200 = vcmp.gt.f32.partialorder %v199, 0.0
    %v201 = vlaneseq
    %v202 = vshrl.u32 %v201, 7
    %v203 = vsub.s32 2, %v202
    %v204 = vrot.slane %v64, %v203
    %v205 = vmul.f32 %v204, %v199
    %v206 = vsel %vm200, %v199, %v205
    %v207 = vld [vmem:[#allocation6] sm:$0xf]
    %v208 = vld [vmem:[#allocation6 + $0x4] sm:$0xf]
    %v209 = vld [vmem:[#allocation6 + $0x8] sm:$0xf]
    %v210 = vld [vmem:[#allocation6 + $0xc] sm:$0xf]
    %v211 = vld [vmem:[#allocation6 + $0x10] sm:$0xf]
    %v212 = vld [vmem:[#allocation6 + $0x14] sm:$0xf]
    %v213 = vld [vmem:[#allocation6 + $0x18] sm:$0xf]
    %v214 = vld [vmem:[#allocation6 + $0x1c] sm:$0xf]
    %v215 = vld [vmem:[#allocation6 + $0x20] sm:$0xf]
    %v216 = vld [vmem:[#allocation6 + $0x24] sm:$0xf]
    %v217 = vld [vmem:[#allocation6 + $0x28] sm:$0xf]
    %v218 = vld [vmem:[#allocation6 + $0x2c] sm:$0xf]
    %v219 = vld [vmem:[#allocation6 + $0x30] sm:$0xf]
    %v220 = vld [vmem:[#allocation6 + $0x34] sm:$0xf]
    %v221 = vld [vmem:[#allocation6 + $0x38] sm:$0xf]
    %v222 = vld [vmem:[#allocation6 + $0x3c] sm:$0xf]
    %v223 = vpack.c.bf16 %v206, %v206
    %v240 = vunpack.c.l.b16 %v207
    %v241 = vunpack.c.l.b16 %v208
    %v242 = vunpack.c.l.b16 %v209
    %v243 = vunpack.c.l.b16 %v210
    %v244 = vunpack.c.l.b16 %v211
    %v245 = vunpack.c.l.b16 %v212
    %v246 = vunpack.c.l.b16 %v213
    %v247 = vunpack.c.l.b16 %v214
    %v248 = vunpack.c.l.b16 %v215
    %v249 = vunpack.c.l.b16 %v216
    %v250 = vunpack.c.l.b16 %v217
    %v251 = vunpack.c.l.b16 %v218
    %v252 = vunpack.c.l.b16 %v219
    %v253 = vunpack.c.l.b16 %v220
    %v254 = vunpack.c.l.b16 %v221
    %v255 = vunpack.c.l.b16 %v222
    %v256 = vpack.c.b16 %v241, %v240
    %v257 = vpack.c.b16 %v243, %v242
    %v258 = vpack.c.b16 %v245, %v244
    %v259 = vpack.c.b16 %v247, %v246
    %v260 = vpack.c.b16 %v249, %v248
    %v261 = vpack.c.b16 %v251, %v250
    %v262 = vpack.c.b16 %v253, %v252
    %v263 = vpack.c.b16 %v255, %v254
    %272 = vmatprep.subr.bf16.mxu0 0
    %273 = vmatpush1.bf16.msra.mxu0 %v256
    %274 = vmatprep.subr.bf16.mxu0 0
    %275 = vmatpush1.bf16.msra.mxu0 %v257
    %276 = vmatprep.subr.bf16.mxu0 0
    %277 = vmatpush1.bf16.msra.mxu0 %v258
    %278 = vmatprep.subr.bf16.mxu0 0
    %279 = vmatpush1.bf16.msra.mxu0 %v259
    %280 = vmatprep.subr.bf16.mxu0 0
    %281 = vmatpush1.bf16.msra.mxu0 %v260
    %282 = vmatprep.subr.bf16.mxu0 0
    %283 = vmatpush1.bf16.msra.mxu0 %v261
    %284 = vmatprep.subr.bf16.mxu0 0
    %285 = vmatpush1.bf16.msra.mxu0 %v262
    %286 = vmatprep.subr.bf16.mxu0 0
    %287 = vmatpush1.bf16.msra.mxu0 %v263
    %288 = vmatprep.subr.bf16.mxu0 0
    %289 = vmatpush1.bf16.msra.mxu0 0
    %290 = vmatprep.subr.bf16.mxu0 0
    %291 = vmatpush1.bf16.msra.mxu0 0
    %292 = vmatprep.subr.bf16.mxu0 0
    %293 = vmatpush1.bf16.msra.mxu0 0
    %294 = vmatprep.subr.bf16.mxu0 0
    %295 = vmatpush1.bf16.msra.mxu0 0
    %296 = vmatprep.subr.bf16.mxu0 0
    %297 = vmatpush1.bf16.msra.mxu0 0
    %298 = vmatprep.subr.bf16.mxu0 0
    %299 = vmatpush1.bf16.msra.mxu0 0
    %300 = vmatprep.subr.bf16.mxu0 0
    %301 = vmatpush1.bf16.msra.mxu0 0
    %302 = vmatprep.subr.bf16.mxu0 0
    %303 = vmatpush1.bf16.msra.mxu0 0
    %304 = vmatprep.mubr.bf16.mxu0 0
    %305 = vmatmul.mubr.bf16.gmra.mrb[0].mxu0 %v223
    %v306 = vpop.f32.mrb[0].mxu0
    %v307 = vadd.f32 0.0, %v306
    %v308 = vpop.f32.mrb[0].mxu0
    %v309 = vpop.f32.mrb[0].mxu0
    %v310 = vpop.f32.mrb[0].mxu0
    %311 = vdwg.mxu0
    %v312 = vrot.slane %v307, 4
    %v313 = vadd.f32 %v307, %v312
    %v314 = vrot.slane %v313, 2
    %v315 = vadd.f32 %v313, %v314
    %v316 = vrot.slane %v315, 1
    %v317 = vadd.f32 %v315, %v316
    %v318 = vmul.f32 %v317, %v176
    %v319 = vsub.f32 %v307, %v318
    %v320 = vmul.f32 %v319, %v319
    %v321 = vrot.slane %v320, 4
    %v322 = vadd.f32 %v320, %v321
    %v323 = vrot.slane %v322, 2
    %v324 = vadd.f32 %v322, %v323
    %v325 = vrot.slane %v324, 1
    %v326 = vadd.f32 %v324, %v325
    %v327 = vmul.f32 %v326, %v176
    %v328 = vadd.f32 %v327, 1e-05
    %v329 = vrsqrt.pop %v328
    %v330 = vmul.f32 %v64, %v329
    %v331 = vlaneseq
    %v332 = vshrl.u32 %v331, 7
    %v333 = vsub.s32 3, %v332
    %v334 = vrot.slane %v330, %v333
    %v335 = vmul.f32 %v319, %v334
    %v336 = vlaneseq
    %v337 = vshrl.u32 %v336, 7
    %v338 = vsub.s32 4, %v337
    %v339 = vrot.slane %v64, %v338
    %v340 = vadd.f32 %v335, %v339
    %vm341 = vcmp.gt.f32.partialorder %v340, 0.0
    %v342 = vlaneseq
    %v343 = vshrl.u32 %v342, 7
    %v344 = vsub.s32 5, %v343
    %v345 = vrot.slane %v64, %v344
    %v346 = vmul.f32 %v345, %v340
    %v347 = vsel %vm341, %v340, %v346
    %v348 = vadd.f32 %v63, %v347
    %349 = vst [vmem:[#allocation8] sm:$0xff] %v348
    // Predicated region
    $region30: #{tpu_custom_call.1} parent=1 // pred_check
      _
    $region31: #{tpu_custom_call.1} parent=1 // pred_check_branch
      %351 = sbr.rel (0) target = $region33
    $region32: #{tpu_custom_call.1} parent=1 // pred_region
      %s353 = ssub.s32 128, 128
      %354 = vsyncadd [#allocation5], %s353
      %s356 = sshll.u32 [#allocation8], 4
      %s357 = int_to_ptr.vmem [resolvable:$true] %s356
      %359 = dma.vmem_to_hbm [thread:$0]  %s357, 128, %s4, [#allocation5]
    $region33: #{tpu_custom_call.1} parent=1 // pred_fallthru
      _
    // Predicated region
    $region34: #{tpu_custom_call.1} parent=1 // pred_check
      _
    $region35: #{tpu_custom_call.1} parent=1 // pred_check_branch
      %361 = sbr.rel (0) target = $region37
    $region36: #{tpu_custom_call.1} parent=1 // pred_region
      %362 = dma.done [#allocation5], 128
    $region37: #{tpu_custom_call.1} parent=1 // pred_fallthru
      _
    %363 = vsyncpa [#allocation4], 1
    %364 = vsyncpa [#allocation7], 1
    %365 = vsyncpa [#allocation5], 1
  %366 = vsyncmov [#allocation2]
  %s367 = vpop.sfrf %366
  %p368 = scmp.eq.s32.totalorder %s367, 0
  %p369 = pneg %p368
  %371 = shalt.err (%p369)

</llo_original>
